<compile_context>
chip_gen: v5e
topology: v5e:2x2
jax: 0.10.0
libtpu: 0.0.40
codegen_flags: <defaults>
</compile_context>

<pallas_src>
import numpy as np

import jax
import jax.numpy as jnp
from jax.experimental import pallas as pl
from jax.experimental.pallas import tpu as pltpu


def _round_up(v, m):
    return ((v + m - 1) // m) * m


# ---------------------------------------------------------------------------
# Kernel 1: phi (Linear -> ReLU -> Linear) on a node tile + segment-sum
# pooling, accumulated into one resident output block per split.
# ---------------------------------------------------------------------------
def _phi_pool_kernel(batch_ref, x_ref, w1_ref, b1_ref, w2_ref, b2_ref, out_ref):
    t = pl.program_id(1)
    cdt = w1_ref.dtype                      # MXU-input dtype: f32 or bf16

    @pl.when(t == 0)
    def _():
        out_ref[...] = jnp.zeros_like(out_ref)

    # ---- phi on this node tile (two MXU matmuls, f32 accumulation) ----
    x = x_ref[...]                                                    # [TN, Hp]
    h = jnp.dot(x, w1_ref[...], preferred_element_type=jnp.float32) + b1_ref[...]
    h = jnp.maximum(h, 0.0)                                           # ReLU (VPU)
    h = jnp.dot(h.astype(cdt), w2_ref[...],
                preferred_element_type=jnp.float32) + b2_ref[...]
    # TODO(synk): nn.Dropout is identity in eval mode; training-mode dropout
    # would use pltpu.prng_seed / pltpu.prng_random_bits here.

    # ---- segment-sum pooling via one-hot mask matmul (MXU) ----
    seg = batch_ref[...]                                              # [1, TN] i32
    b_pad = out_ref.shape[1]
    tn = seg.shape[1]
    seg_iota = jax.lax.broadcasted_iota(jnp.int32, (b_pad, tn), 0)    # [B_pad, TN]
    mask = (seg_iota == seg).astype(cdt)                              # exact 0/1
    out_ref[...] += jnp.dot(mask, h.astype(cdt),
                            preferred_element_type=jnp.float32)[None]  # [1,B_pad,Hp]


# ---------------------------------------------------------------------------
# Kernel 2: reduce per-split partials + rho (Linear -> ReLU -> Linear).
# Single invocation; all operands are tiny and live fully in VMEM.
# ---------------------------------------------------------------------------
def _rho_kernel(part_ref, w3_ref, b3_ref, w4_ref, b4_ref, out_ref):
    cdt = w3_ref.dtype
    pooled = jnp.sum(part_ref[...], axis=0)                           # [B_pad, Hp] f32
    r = jnp.dot(pooled.astype(cdt), w3_ref[...],
                preferred_element_type=jnp.float32) + b3_ref[...]
    r = jnp.maximum(r, 0.0)
    r = jnp.dot(r.astype(cdt), w4_ref[...],
                preferred_element_type=jnp.float32) + b4_ref[...]
    out_ref[...] = r.astype(out_ref.dtype)


def invariant_layer(x, batch, params, num_graphs, *,
                    tile_n=512, compute_dtype=jnp.float32, num_splits=None):
    """x: [N, H] float32, batch: [N] int32 segment ids in [0, num_graphs)."""
    n, h = x.shape
    h_pad = _round_up(max(h, 128), 128)            # lane-dense hidden dim
    b_pad = _round_up(max(num_graphs, 8), 8)       # sublane-pad graph count
    wbytes = jnp.dtype(compute_dtype).itemsize

    # Cap tile_n so (double-buffered streams + resident weights + temporaries)
    # stay under a budget that also fits v7x's 64 MiB physical VMEM.
    tile_n = max(128, (int(tile_n) // 128) * 128)

    def vmem_est(tn):
        return (2 * 2 * h_pad * h_pad * wbytes             # w1, w2 (x2 buffering slack)
                + 2 * 2 * h_pad * 4                        # b1, b2
                + 2 * tn * (h_pad * wbytes + 4)            # double-buffered x + ids
                + 2 * b_pad * h_pad * 4                    # resident output block
                + (b_pad * tn + 2 * tn * h_pad + b_pad * h_pad) * 4)   # temporaries

    budget = 48 * 1024 * 1024
    while tile_n > 128 and vmem_est(tile_n) > budget:
        tile_n -= 128

    # Split the node loop across TensorCores (gains on v7x's 2 TCs; near-free
    # elsewhere) whenever there are at least two node tiles of work.
    if num_splits is None:
        num_splits = 2 if -(-n // tile_n) >= 2 else 1
    num_splits = max(1, int(num_splits))

    n_pad = _round_up(max(n, 1), num_splits * tile_n)
    tiles_per_split = n_pad // (num_splits * tile_n)

    # Pad nodes; padded rows get segment id -1 so they match no graph.
    x_p = jnp.pad(x, ((0, n_pad - n), (0, h_pad - h))).astype(compute_dtype)
    batch_p = jnp.pad(batch.astype(jnp.int32), (0, n_pad - n),
                      constant_values=-1).reshape(1, n_pad)

    # Zero-pad weights to [Hp, Hp]; biases stay f32 (added post f32-accumulation).
    w1, b1, w2, b2, w3, b3, w4, b4 = params

    def padw(w):
        return jnp.pad(w, ((0, h_pad - h), (0, h_pad - h))).astype(compute_dtype)

    def padb(b):
        return jnp.pad(b, (0, h_pad - h)).reshape(1, h_pad).astype(jnp.float32)

    w1p, w2p, w3p, w4p = padw(w1), padw(w2), padw(w3), padw(w4)
    b1p, b2p, b3p, b4p = padb(b1), padb(b2), padb(b3), padb(b4)

    grid = (num_splits, tiles_per_split)
    full = lambda s, t: (0, 0)

    flops1 = 2 * n_pad * h_pad * (2 * h_pad + b_pad)
    bytes1 = (n_pad * h_pad * wbytes + n_pad * 4
              + 2 * h_pad * h_pad * wbytes + 2 * h_pad * 4
              + num_splits * b_pad * h_pad * 4)
    vmem_limit = int(min(64 * 1024 * 1024,
                         max(32 * 1024 * 1024, 2 * vmem_est(tile_n))))

    # ---- phase 1: phi + pooled partial sums, one block per split ----------
    partials = pl.pallas_call(
        _phi_pool_kernel,
        out_shape=jax.ShapeDtypeStruct((num_splits, b_pad, h_pad), jnp.float32),
        grid_spec=pltpu.PrefetchScalarGridSpec(
            num_scalar_prefetch=0,
            grid=grid,
            in_specs=[
                pl.BlockSpec((1, tile_n),
                             lambda s, t: (0, s * tiles_per_split + t)),   # batch ids
                pl.BlockSpec((tile_n, h_pad),
                             lambda s, t: (s * tiles_per_split + t, 0)),   # x tile
                pl.BlockSpec((h_pad, h_pad), full), pl.BlockSpec((1, h_pad), full),  # phi L1
                pl.BlockSpec((h_pad, h_pad), full), pl.BlockSpec((1, h_pad), full),  # phi L2
            ],
            out_specs=pl.BlockSpec((1, b_pad, h_pad),
                                   lambda s, t: (s, 0, 0)),                # per-split acc
        ),
        compiler_params=pltpu.CompilerParams(
            dimension_semantics=("parallel", "arbitrary"),
            vmem_limit_bytes=vmem_limit),
        cost_estimate=pl.CostEstimate(flops=flops1, transcendentals=0,
                                      bytes_accessed=bytes1),
    )(batch_p, x_p, w1p, b1p, w2p, b2p)

    # ---- phase 2: cross-split reduce + rho (tiny, single invocation) ------
    flops2 = 4 * b_pad * h_pad * h_pad
    bytes2 = ((num_splits + 1) * b_pad * h_pad * 4
              + 2 * h_pad * h_pad * wbytes + 2 * h_pad * 4)
    out = pl.pallas_call(
        _rho_kernel,
        out_shape=jax.ShapeDtypeStruct((b_pad, h_pad), jnp.float32),
        cost_estimate=pl.CostEstimate(flops=flops2, transcendentals=0,
                                      bytes_accessed=bytes2),
    )(partials, w3p, b3p, w4p, b4p)

    return out[:num_graphs, :h]


def _init_params(key, h):
    ks = jax.random.split(key, 8)
    scale = 1.0 / np.sqrt(h)

    def lin(kw, kb):
        w = jax.random.uniform(kw, (h, h), jnp.float32, -scale, scale)
        b = jax.random.uniform(kb, (h,), jnp.float32, -scale, scale)
        return w, b

    w1, b1 = lin(ks[0], ks[1])
    w2, b2 = lin(ks[2], ks[3])
    w3, b3 = lin(ks[4], ks[5])
    w4, b4 = lin(ks[6], ks[7])
    return (w1, b1, w2, b2, w3, b3, w4, b4)


def _reference(x, batch, params, num_graphs):
    w1, b1, w2, b2, w3, b3, w4, b4 = params
    h = jnp.maximum(x @ w1 + b1, 0.0) @ w2 + b2
    pooled = jax.ops.segment_sum(h, batch, num_segments=num_graphs)
    return jnp.maximum(pooled @ w3 + b3, 0.0) @ w4 + b4


if __name__ == "__main__":
    key = jax.random.PRNGKey(0)

    # --- small config matching the module (hidden_dim=32) ------------------
    H = 32           # hidden_dim
    N = 16           # total nodes across all graphs in the batch
    B = 2            # number of graphs (segments)

    kx, kb, kp = jax.random.split(key, 3)
    x = jax.random.normal(kx, (N, H), jnp.float32)
    batch = jnp.sort(jax.random.randint(kb, (N,), 0, B)).astype(jnp.int32)
    params = _init_params(kp, H)

    ref = _reference(x, batch, params, B)

    # f32 MXU path — tight check against the pure-JAX reference.
    out_f32 = invariant_layer(x, batch, params, num_graphs=B,
                              tile_n=256, compute_dtype=jnp.float32)
    out_f32 = jax.block_until_ready(out_f32)
    np.testing.assert_allclose(np.asarray(out_f32), np.asarray(ref),
                               rtol=1e-5, atol=1e-5)

    # bf16 MXU-input path (f32 accumulation) — loose check.
    out_bf16 = invariant_layer(x, batch, params, num_graphs=B,
                               tile_n=256, compute_dtype=jnp.bfloat16)
    out_bf16 = jax.block_until_ready(out_bf16)
    np.testing.assert_allclose(np.asarray(out_bf16), np.asarray(ref),
                               rtol=1e-1, atol=1e-1)

    # --- larger config exercising the multi-tile / multi-split path --------
    H2, N2, B2 = 32, 600, 5
    kx2, kb2, kp2 = jax.random.split(jax.random.PRNGKey(1), 3)
    x2 = jax.random.normal(kx2, (N2, H2), jnp.float32)
    batch2 = jnp.sort(jax.random.randint(kb2, (N2,), 0, B2)).astype(jnp.int32)
    params2 = _init_params(kp2, H2)
    ref2 = _reference(x2, batch2, params2, B2)

    out2 = invariant_layer(x2, batch2, params2, num_graphs=B2,
                           tile_n=256, compute_dtype=jnp.float32, num_splits=2)
    out2 = jax.block_until_ready(out2)
    np.testing.assert_allclose(np.asarray(out2), np.asarray(ref2),
                               rtol=1e-3, atol=1e-3)

    print("KERNEL_OK")
</pallas_src>

<mosaic_0001>
module attributes {stable_mosaic.version = 11 : i64} {
  func.func @_phi_pool_kernel(%arg0: i32, %arg1: i32, %arg2: memref<1x256xi32, #tpu.memory_space<vmem>>, %arg3: memref<256x128xf32, #tpu.memory_space<vmem>>, %arg4: memref<128x128xf32, #tpu.memory_space<vmem>>, %arg5: memref<1x128xf32, #tpu.memory_space<vmem>>, %arg6: memref<128x128xf32, #tpu.memory_space<vmem>>, %arg7: memref<1x128xf32, #tpu.memory_space<vmem>>, %arg8: memref<1x8x128xf32, #tpu.memory_space<vmem>>) attributes {dimension_semantics = [#tpu.dimension_semantics<parallel>, #tpu.dimension_semantics<arbitrary>], iteration_bounds = array<i64: 1, 1>, scalar_prefetch = 0 : i64, scratch_operands = 0 : i64, tpu.core_type = #tpu.core_type<tc>, window_params = [{transform_indices = @transform_0, window_bounds = array<i64: 1, 256>}, {transform_indices = @transform_1, window_bounds = array<i64: 256, 128>}, {pipeline_mode = #tpu.pipeline_mode<synchronous>, transform_indices = @transform_2, window_bounds = array<i64: 128, 128>}, {pipeline_mode = #tpu.pipeline_mode<synchronous>, transform_indices = @transform_3, window_bounds = array<i64: 1, 128>}, {pipeline_mode = #tpu.pipeline_mode<synchronous>, transform_indices = @transform_4, window_bounds = array<i64: 128, 128>}, {pipeline_mode = #tpu.pipeline_mode<synchronous>, transform_indices = @transform_5, window_bounds = array<i64: 1, 128>}, {transform_indices = @transform_6, window_bounds = array<i64: 1, 8, 128>}]} {
    %c0_i32 = arith.constant 0 : i32
    %0 = arith.cmpi eq, %arg1, %c0_i32 : i32
    %1 = arith.extui %0 : i1 to i32
    %c0_i32_0 = arith.constant 0 : i32
    %2 = arith.cmpi ne, %1, %c0_i32_0 : i32
    scf.if %2 {
      %cst_21 = arith.constant 0.000000e+00 : f32
      %27 = vector.broadcast %cst_21 : f32 to vector<1x8x128xf32>
      %c0_22 = arith.constant 0 : index
      %c0_23 = arith.constant 0 : index
      %c0_24 = arith.constant 0 : index
      %28 = vector.load %arg8[%c0_22, %c0_23, %c0_24] : memref<1x8x128xf32, #tpu.memory_space<vmem>>, vector<1x8x128xf32>
      tpu.vector_store %arg8[%c0_22, %c0_23, %c0_24], %27 {strides = array<i32>} : memref<1x8x128xf32, #tpu.memory_space<vmem>>, vector<1x8x128xf32>,
    } else {
    }
    %c0 = arith.constant 0 : index
    %c0_1 = arith.constant 0 : index
    %3 = vector.load %arg3[%c0, %c0_1] : memref<256x128xf32, #tpu.memory_space<vmem>>, vector<256x128xf32>
    %c0_2 = arith.constant 0 : index
    %c0_3 = arith.constant 0 : index
    %4 = vector.load %arg4[%c0_2, %c0_3] : memref<128x128xf32, #tpu.memory_space<vmem>>, vector<128x128xf32>
    %cst = arith.constant dense<0.000000e+00> : vector<256x128xf32>
    %5 = tpu.matmul %3, %4, %cst {dimension_numbers = #tpu.dot_dimension_numbers<[1], [0], [0], [1], [0, 0, 1, 1], [], []>} : vector<256x128xf32>, vector<128x128xf32>, vector<256x128xf32> -> vector<256x128xf32>
    %c0_4 = arith.constant 0 : index
    %c0_5 = arith.constant 0 : index
    %6 = vector.load %arg5[%c0_4, %c0_5] : memref<1x128xf32, #tpu.memory_space<vmem>>, vector<1x128xf32>
    %7 = vector.broadcast %6 : vector<1x128xf32> to vector<256x128xf32>
    %8 = arith.addf %5, %7 : vector<256x128xf32>
    %cst_6 = arith.constant 0.000000e+00 : f32
    %9 = vector.broadcast %cst_6 : f32 to vector<256x128xf32>
    %10 = arith.maximumf %8, %9 : vector<256x128xf32>
    %c0_7 = arith.constant 0 : index
    %c0_8 = arith.constant 0 : index
    %11 = vector.load %arg6[%c0_7, %c0_8] : memref<128x128xf32, #tpu.memory_space<vmem>>, vector<128x128xf32>
    %cst_9 = arith.constant dense<0.000000e+00> : vector<256x128xf32>
    %12 = tpu.matmul %10, %11, %cst_9 {dimension_numbers = #tpu.dot_dimension_numbers<[1], [0], [0], [1], [0, 0, 1, 1], [], []>} : vector<256x128xf32>, vector<128x128xf32>, vector<256x128xf32> -> vector<256x128xf32>
    %c0_10 = arith.constant 0 : index
    %c0_11 = arith.constant 0 : index
    %13 = vector.load %arg7[%c0_10, %c0_11] : memref<1x128xf32, #tpu.memory_space<vmem>>, vector<1x128xf32>
    %14 = vector.broadcast %13 : vector<1x128xf32> to vector<256x128xf32>
    %15 = arith.addf %12, %14 : vector<256x128xf32>
    %c0_12 = arith.constant 0 : index
    %c0_13 = arith.constant 0 : index
    %16 = vector.load %arg2[%c0_12, %c0_13] : memref<1x256xi32, #tpu.memory_space<vmem>>, vector<1x256xi32>
    %17 = tpu.iota {dimensions = array<i32: 0>} : vector<8x256xi32>
    %18 = vector.broadcast %16 : vector<1x256xi32> to vector<8x256xi32>
    %19 = arith.cmpi eq, %17, %18 : vector<8x256xi32>
    %20 = arith.extui %19 : vector<8x256xi1> to vector<8x256xi32>
    %21 = arith.sitofp %20 : vector<8x256xi32> to vector<8x256xf32>
    %c0_14 = arith.constant 0 : index
    %c0_15 = arith.constant 0 : index
    %c0_16 = arith.constant 0 : index
    %22 = vector.load %arg8[%c0_14, %c0_15, %c0_16] : memref<1x8x128xf32, #tpu.memory_space<vmem>>, vector<1x8x128xf32>
    %cst_17 = arith.constant dense<0.000000e+00> : vector<8x128xf32>
    %23 = tpu.matmul %21, %15, %cst_17 {dimension_numbers = #tpu.dot_dimension_numbers<[1], [0], [0], [1], [0, 0, 1, 1], [], []>} : vector<8x256xf32>, vector<256x128xf32>, vector<8x128xf32> -> vector<8x128xf32>
    %24 = vector.shape_cast %23 : vector<8x128xf32> to vector<1x8x128xf32>
    %25 = arith.addf %22, %24 : vector<1x8x128xf32>
    %c0_18 = arith.constant 0 : index
    %c0_19 = arith.constant 0 : index
    %c0_20 = arith.constant 0 : index
    %26 = vector.load %arg8[%c0_18, %c0_19, %c0_20] : memref<1x8x128xf32, #tpu.memory_space<vmem>>, vector<1x8x128xf32>
    tpu.vector_store %arg8[%c0_18, %c0_19, %c0_20], %25 {strides = array<i32>} : memref<1x8x128xf32, #tpu.memory_space<vmem>>, vector<1x8x128xf32>,
    return
  }
  func.func @transform_0(%arg0: i32, %arg1: i32) -> (i32, i32) {
    %c1_i32 = arith.constant 1 : i32
    %0 = arith.muli %arg0, %c1_i32 : i32
    %1 = arith.addi %0, %arg1 : i32
    %c0_i32 = arith.constant 0 : i32
    %c0_i32_0 = arith.constant 0 : i32
    return %c0_i32, %1 : i32, i32
  }
  func.func @transform_1(%arg0: i32, %arg1: i32) -> (i32, i32) {
    %c1_i32 = arith.constant 1 : i32
    %0 = arith.muli %arg0, %c1_i32 : i32
    %1 = arith.addi %0, %arg1 : i32
    %c0_i32 = arith.constant 0 : i32
    %c0_i32_0 = arith.constant 0 : i32
    return %1, %c0_i32 : i32, i32
  }
  func.func @transform_2(%arg0: i32, %arg1: i32) -> (i32, i32) {
    %c0_i32 = arith.constant 0 : i32
    %c0_i32_0 = arith.constant 0 : i32
    %c0_i32_1 = arith.constant 0 : i32
    return %c0_i32, %c0_i32_0 : i32, i32
  }
  func.func @transform_3(%arg0: i32, %arg1: i32) -> (i32, i32) {
    %c0_i32 = arith.constant 0 : i32
    %c0_i32_0 = arith.constant 0 : i32
    %c0_i32_1 = arith.constant 0 : i32
    return %c0_i32, %c0_i32_0 : i32, i32
  }
  func.func @transform_4(%arg0: i32, %arg1: i32) -> (i32, i32) {
    %c0_i32 = arith.constant 0 : i32
    %c0_i32_0 = arith.constant 0 : i32
    %c0_i32_1 = arith.constant 0 : i32
    return %c0_i32, %c0_i32_0 : i32, i32
  }
  func.func @transform_5(%arg0: i32, %arg1: i32) -> (i32, i32) {
    %c0_i32 = arith.constant 0 : i32
    %c0_i32_0 = arith.constant 0 : i32
    %c0_i32_1 = arith.constant 0 : i32
    return %c0_i32, %c0_i32_0 : i32, i32
  }
  func.func @transform_6(%arg0: i32, %arg1: i32) -> (i32, i32, i32) {
    %c0_i32 = arith.constant 0 : i32
    %c0_i32_0 = arith.constant 0 : i32
    %c0_i32_1 = arith.constant 0 : i32
    return %arg0, %c0_i32, %c0_i32_0 : i32, i32, i32
  }
}

</mosaic_0001>

<llo_original>
// kernel: tpu_custom_call.1
$region0: #{tpu_custom_call.1}
  #allocation0 [shape = 'u32[]', space=smem, size = 0x4, offset = 0x4, fixed_abs, tag = 'smem constant byte address 0x4 - core index']
  #allocation1 [shape = 'u32[72,128]{1,0:T(1,128)}', space=vmem, size = 0x9000, scoped, tag = 'internal scratch']
  %s0 = inlined_call_operand.hbm [shape: s32[1,256], index: 0, kind: input, shape index: {}]
  %s1 = inlined_call_operand.hbm [shape: f32[256,128], index: 1, kind: input, shape index: {}]
  %s2 = inlined_call_operand.hbm [shape: f32[128,128], index: 2, kind: input, shape index: {}]
  %s3 = inlined_call_operand.vmem [shape: f32[1,128], index: 3, kind: input, shape index: {}]
  %s4 = inlined_call_operand.hbm [shape: f32[128,128], index: 4, kind: input, shape index: {}]
  %s5 = inlined_call_operand.vmem [shape: f32[1,128], index: 5, kind: input, shape index: {}]
  %s6 = inlined_call_operand.hbm [shape: f32[1,8,128], index: 6, kind: output, shape index: {}]
  %s7 = sld [smem:[#allocation0]]
  $region54: #{tpu_custom_call.1} parent=0
    _
  %s9 = ssub.s32 1, %s7
  %s10 = scalar_select 0, %s9, %s7
  $region1: #{tpu_custom_call.1} parent=0
    #allocation2 [shape = 'u8[1024]{0}', space=vmem, size = 0x400, scoped, tag = 'input window, operand 0, single buffered']
    #allocation3 [shape = 's32[1]{0}', space=sflag, size = 0x4, scoped, tag = 'scoped memory for tpu_custom_call.1']
    #allocation4 [shape = 's32[1]{0}', space=sflag, size = 0x4, scoped, tag = 'scoped memory for tpu_custom_call.1']
    #allocation5 [shape = 'u8[131072]{0}', space=vmem, size = 0x20000, scoped, tag = 'input window, operand 1, single buffered']
    #allocation6 [shape = 's32[1]{0}', space=sflag, size = 0x4, scoped, tag = 'scoped memory for tpu_custom_call.1']
    #allocation7 [shape = 'u8[65536]{0}', space=vmem, size = 0x10000, scoped, tag = 'input window, operand 2, single buffered']
    #allocation8 [shape = 'u8[65536]{0}', space=vmem, size = 0x10000, scoped, tag = 'input window, operand 4, single buffered']
    #allocation9 [shape = 's32[1]{0}', space=sflag, size = 0x4, scoped, tag = 'scoped memory for tpu_custom_call.1']
    #allocation10 [shape = 'u8[4096]{0}', space=vmem, size = 0x1000, scoped, tag = 'output window, operand 0, single buffered']
    %11 = vsyncpa [#allocation3], 0
    %12 = vsyncpa [#allocation6], 0
    %13 = vsyncpa [#allocation9], 0
    %14 = vsyncpa [#allocation4], 0
    // Predicated region
    $region2: #{tpu_custom_call.1} parent=1 // pred_check
      _
    $region3: #{tpu_custom_call.1} parent=1 // pred_check_branch
      %16 = sbr.rel (0) target = $region5
    $region4: #{tpu_custom_call.1} parent=1 // pred_region
      %s17 = sadd.s32 0, 0
      %s18 = smul.u32 2, %s17
      %20 = vsyncadd [#allocation3], 0
      %s21 = scalar_lea.hbm %s0, %s18
      %s23 = sshll.u32 %s21, 4
      %s24 = int_to_ptr.hbm [resolvable:$true] %s23
      %s25 = sshll.u32 [#allocation2], 4
      %s26 = int_to_ptr.vmem [resolvable:$true] %s25
      %28 = dma.hbm_to_vmem [thread:$0]  %s24, 32, %s26, [#allocation3]
    $region5: #{tpu_custom_call.1} parent=1 // pred_fallthru
      _
    // Predicated region
    $region6: #{tpu_custom_call.1} parent=1 // pred_check
      _
    $region7: #{tpu_custom_call.1} parent=1 // pred_check_branch
      %30 = sbr.rel (0) target = $region9
    $region8: #{tpu_custom_call.1} parent=1 // pred_region
      %s31 = sadd.s32 0, 0
      %s32 = smul.u32 32, %s31
      %34 = vsyncadd [#allocation6], 0
      %s35 = smul.addr %s32, 8
      %s36 = scalar_lea.hbm %s1, %s35
      %s37 = sshll.u32 %s36, 4
      %s38 = int_to_ptr.hbm [resolvable:$true] %s37
      %s39 = sshll.u32 [#allocation5], 4
      %s40 = int_to_ptr.vmem [resolvable:$true] %s39
      %45 = dma.hbm_to_vmem [thread:$0]  %s38, 4096, %s40, [#allocation6], 128, 128, 8
    $region9: #{tpu_custom_call.1} parent=1 // pred_fallthru
      _
    // Predicated region
    $region10: #{tpu_custom_call.1} parent=1 // pred_check
      _
    $region11: #{tpu_custom_call.1} parent=1 // pred_check_branch
      %47 = sbr.rel (0) target = $region13
    $region12: #{tpu_custom_call.1} parent=1 // pred_region
      %49 = vsyncadd [#allocation6], 0
      %s50 = sshll.u32 %s2, 4
      %s51 = int_to_ptr.hbm [resolvable:$true] %s50
      %s52 = sshll.u32 [#allocation7], 4
      %s53 = int_to_ptr.vmem [resolvable:$true] %s52
      %58 = dma.hbm_to_vmem [thread:$0]  %s51, 2048, %s53, [#allocation6], 128, 128, 8
    $region13: #{tpu_custom_call.1} parent=1 // pred_fallthru
      _
    // Predicated region
    $region14: #{tpu_custom_call.1} parent=1 // pred_check
      _
    $region15: #{tpu_custom_call.1} parent=1 // pred_check_branch
      %60 = sbr.rel (0) target = $region17
    $region16: #{tpu_custom_call.1} parent=1 // pred_region
      _
    $region17: #{tpu_custom_call.1} parent=1 // pred_fallthru
      _
    // Predicated region
    $region18: #{tpu_custom_call.1} parent=1 // pred_check
      _
    $region19: #{tpu_custom_call.1} parent=1 // pred_check_branch
      %62 = sbr.rel (0) target = $region21
    $region20: #{tpu_custom_call.1} parent=1 // pred_region
      %64 = vsyncadd [#allocation9], 0
      %s65 = sshll.u32 %s4, 4
      %s66 = int_to_ptr.hbm [resolvable:$true] %s65
      %s67 = sshll.u32 [#allocation8], 4
      %s68 = int_to_ptr.vmem [resolvable:$true] %s67
      %73 = dma.hbm_to_vmem [thread:$0]  %s66, 2048, %s68, [#allocation9], 128, 128, 8
    $region21: #{tpu_custom_call.1} parent=1 // pred_fallthru
      _
    // Predicated region
    $region22: #{tpu_custom_call.1} parent=1 // pred_check
      _
    $region23: #{tpu_custom_call.1} parent=1 // pred_check_branch
      %75 = sbr.rel (0) target = $region25
    $region24: #{tpu_custom_call.1} parent=1 // pred_region
      _
    $region25: #{tpu_custom_call.1} parent=1 // pred_fallthru
      _
    // Predicated region
    $region26: #{tpu_custom_call.1} parent=1 // pred_check
      _
    $region27: #{tpu_custom_call.1} parent=1 // pred_check_branch
      %77 = sbr.rel (0) target = $region29
    $region28: #{tpu_custom_call.1} parent=1 // pred_region
      %79 = dma.done [#allocation3], 32
    $region29: #{tpu_custom_call.1} parent=1 // pred_fallthru
      _
    // Predicated region
    $region30: #{tpu_custom_call.1} parent=1 // pred_check
      _
    $region31: #{tpu_custom_call.1} parent=1 // pred_check_branch
      %81 = sbr.rel (0) target = $region33
    $region32: #{tpu_custom_call.1} parent=1 // pred_region
      %83 = dma.done [#allocation6], 4096
    $region33: #{tpu_custom_call.1} parent=1 // pred_fallthru
      _
    // Predicated region
    $region34: #{tpu_custom_call.1} parent=1 // pred_check
      _
    $region35: #{tpu_custom_call.1} parent=1 // pred_check_branch
      %85 = sbr.rel (0) target = $region37
    $region36: #{tpu_custom_call.1} parent=1 // pred_region
      %87 = dma.done [#allocation6], 2048
    $region37: #{tpu_custom_call.1} parent=1 // pred_fallthru
      _
    // Predicated region
    $region38: #{tpu_custom_call.1} parent=1 // pred_check
      _
    $region39: #{tpu_custom_call.1} parent=1 // pred_check_branch
      %89 = sbr.rel (0) target = $region41
    $region40: #{tpu_custom_call.1} parent=1 // pred_region
      %91 = dma.done [#allocation9], 2048
    $region41: #{tpu_custom_call.1} parent=1 // pred_fallthru
      _
    %s92 = sadd.s32 0, 0
    %s93 = smul.u32 2, %s92
    %s94 = sadd.s32 0, 0
    %s95 = smul.u32 32, %s94
    %p96 = scmp.eq.s32.totalorder 0, 0
    // Predicated region
    $region42: #{tpu_custom_call.1} parent=1 // pred_check
      %p97 = pneg %p96
    $region43: #{tpu_custom_call.1} parent=1 // pred_check_branch
      %99 = sbr.rel (%p97) target = $region45
    $region44: #{tpu_custom_call.1} parent=1 // pred_region
      %100 = vst [vmem:[#allocation10] sm:$0xff] 0.0
    $region45: #{tpu_custom_call.1} parent=1 // pred_fallthru
      _
    %v101 = vld [vmem:[#allocation5] sm:$0xff]
    %v102 = vld [vmem:[#allocation5 + $0x8] sm:$0xff]
    %v103 = vld [vmem:[#allocation5 + $0x10] sm:$0xff]
    %v104 = vld [vmem:[#allocation5 + $0x18] sm:$0xff]
    %v105 = vld [vmem:[#allocation5 + $0x20] sm:$0xff]
    %v106 = vld [vmem:[#allocation5 + $0x28] sm:$0xff]
    %v107 = vld [vmem:[#allocation5 + $0x30] sm:$0xff]
    %v108 = vld [vmem:[#allocation5 + $0x38] sm:$0xff]
    %v109 = vld [vmem:[#allocation5 + $0x40] sm:$0xff]
    %v110 = vld [vmem:[#allocation5 + $0x48] sm:$0xff]
    %v111 = vld [vmem:[#allocation5 + $0x50] sm:$0xff]
    %v112 = vld [vmem:[#allocation5 + $0x58] sm:$0xff]
    %v113 = vld [vmem:[#allocation5 + $0x60] sm:$0xff]
    %v114 = vld [vmem:[#allocation5 + $0x68] sm:$0xff]
    %v115 = vld [vmem:[#allocation5 + $0x70] sm:$0xff]
    %v116 = vld [vmem:[#allocation5 + $0x78] sm:$0xff]
    %v117 = vld [vmem:[#allocation5 + $0x80] sm:$0xff]
    %v118 = vld [vmem:[#allocation5 + $0x88] sm:$0xff]
    %v119 = vld [vmem:[#allocation5 + $0x90] sm:$0xff]
    %v120 = vld [vmem:[#allocation5 + $0x98] sm:$0xff]
    %v121 = vld [vmem:[#allocation5 + $0xa0] sm:$0xff]
    %v122 = vld [vmem:[#allocation5 + $0xa8] sm:$0xff]
    %v123 = vld [vmem:[#allocation5 + $0xb0] sm:$0xff]
    %v124 = vld [vmem:[#allocation5 + $0xb8] sm:$0xff]
    %v125 = vld [vmem:[#allocation5 + $0xc0] sm:$0xff]
    %v126 = vld [vmem:[#allocation5 + $0xc8] sm:$0xff]
    %v127 = vld [vmem:[#allocation5 + $0xd0] sm:$0xff]
    %v128 = vld [vmem:[#allocation5 + $0xd8] sm:$0xff]
    %v129 = vld [vmem:[#allocation5 + $0xe0] sm:$0xff]
    %v130 = vld [vmem:[#allocation5 + $0xe8] sm:$0xff]
    %v131 = vld [vmem:[#allocation5 + $0xf0] sm:$0xff]
    %v132 = vld [vmem:[#allocation5 + $0xf8] sm:$0xff]
    %v133 = vld [vmem:[#allocation7] sm:$0xff]
    %v134 = vld [vmem:[#allocation7 + $0x8] sm:$0xff]
    %v135 = vld [vmem:[#allocation7 + $0x10] sm:$0xff]
    %v136 = vld [vmem:[#allocation7 + $0x18] sm:$0xff]
    %v137 = vld [vmem:[#allocation7 + $0x20] sm:$0xff]
    %v138 = vld [vmem:[#allocation7 + $0x28] sm:$0xff]
    %v139 = vld [vmem:[#allocation7 + $0x30] sm:$0xff]
    %v140 = vld [vmem:[#allocation7 + $0x38] sm:$0xff]
    %v141 = vld [vmem:[#allocation7 + $0x40] sm:$0xff]
    %v142 = vld [vmem:[#allocation7 + $0x48] sm:$0xff]
    %v143 = vld [vmem:[#allocation7 + $0x50] sm:$0xff]
    %v144 = vld [vmem:[#allocation7 + $0x58] sm:$0xff]
    %v145 = vld [vmem:[#allocation7 + $0x60] sm:$0xff]
    %v146 = vld [vmem:[#allocation7 + $0x68] sm:$0xff]
    %v147 = vld [vmem:[#allocation7 + $0x70] sm:$0xff]
    %v148 = vld [vmem:[#allocation7 + $0x78] sm:$0xff]
    %v149 = vld [vmem:[%s3] sm:$0x1]
    %v151 = vperm.slane %v149, 0
    %153 = vmatpush.msra.mxu0 %v148
    %154 = vmatpush.msra.mxu0 %v147
    %155 = vmatpush.msra.mxu0 %v146
    %156 = vmatpush.msra.mxu0 %v145
    %157 = vmatpush.msra.mxu0 %v144
    %158 = vmatpush.msra.mxu0 %v143
    %159 = vmatpush.msra.mxu0 %v142
    %160 = vmatpush.msra.mxu0 %v141
    %161 = vmatpush.msra.mxu0 %v140
    %162 = vmatpush.msra.mxu0 %v139
    %163 = vmatpush.msra.mxu0 %v138
    %164 = vmatpush.msra.mxu0 %v137
    %165 = vmatpush.msra.mxu0 %v136
    %166 = vmatpush.msra.mxu0 %v135
    %167 = vmatpush.msra.mxu0 %v134
    %168 = vmatpush.msra.mxu0 %v133
    %169 = vmatmul.f32.gmra.mxu0 %v101
    %v170 = vpop.f32.mrf.mxu0
    %v171 = vadd.f32 %v151, %v170
    %172 = vmatmul.f32.gmra.mxu0 %v102
    %v173 = vpop.f32.mrf.mxu0
    %v174 = vadd.f32 %v151, %v173
    %175 = vmatmul.f32.gmra.mxu0 %v103
    %v176 = vpop.f32.mrf.mxu0
    %v177 = vadd.f32 %v151, %v176
    %178 = vmatmul.f32.gmra.mxu0 %v104
    %v179 = vpop.f32.mrf.mxu0
    %v180 = vadd.f32 %v151, %v179
    %181 = vmatmul.f32.gmra.mxu0 %v105
    %v182 = vpop.f32.mrf.mxu0
    %v183 = vadd.f32 %v151, %v182
    %184 = vmatmul.f32.gmra.mxu0 %v106
    %v185 = vpop.f32.mrf.mxu0
    %v186 = vadd.f32 %v151, %v185
    %187 = vmatmul.f32.gmra.mxu0 %v107
    %v188 = vpop.f32.mrf.mxu0
    %v189 = vadd.f32 %v151, %v188
    %190 = vmatmul.f32.gmra.mxu0 %v108
    %v191 = vpop.f32.mrf.mxu0
    %v192 = vadd.f32 %v151, %v191
    %193 = vmatmul.f32.gmra.mxu0 %v109
    %v194 = vpop.f32.mrf.mxu0
    %v195 = vadd.f32 %v151, %v194
    %196 = vmatmul.f32.gmra.mxu0 %v110
    %v197 = vpop.f32.mrf.mxu0
    %v198 = vadd.f32 %v151, %v197
    %199 = vmatmul.f32.gmra.mxu0 %v111
    %v200 = vpop.f32.mrf.mxu0
    %v201 = vadd.f32 %v151, %v200
    %202 = vmatmul.f32.gmra.mxu0 %v112
    %v203 = vpop.f32.mrf.mxu0
    %v204 = vadd.f32 %v151, %v203
    %205 = vmatmul.f32.gmra.mxu0 %v113
    %v206 = vpop.f32.mrf.mxu0
    %v207 = vadd.f32 %v151, %v206
    %208 = vmatmul.f32.gmra.mxu0 %v114
    %v209 = vpop.f32.mrf.mxu0
    %v210 = vadd.f32 %v151, %v209
    %211 = vmatmul.f32.gmra.mxu0 %v115
    %v212 = vpop.f32.mrf.mxu0
    %v213 = vadd.f32 %v151, %v212
    %214 = vmatmul.f32.gmra.mxu0 %v116
    %v215 = vpop.f32.mrf.mxu0
    %v216 = vadd.f32 %v151, %v215
    %217 = vmatmul.f32.gmra.mxu0 %v117
    %v218 = vpop.f32.mrf.mxu0
    %v219 = vadd.f32 %v151, %v218
    %220 = vmatmul.f32.gmra.mxu0 %v118
    %v221 = vpop.f32.mrf.mxu0
    %v222 = vadd.f32 %v151, %v221
    %223 = vmatmul.f32.gmra.mxu0 %v119
    %v224 = vpop.f32.mrf.mxu0
    %v225 = vadd.f32 %v151, %v224
    %226 = vmatmul.f32.gmra.mxu0 %v120
    %v227 = vpop.f32.mrf.mxu0
    %v228 = vadd.f32 %v151, %v227
    %229 = vmatmul.f32.gmra.mxu0 %v121
    %v230 = vpop.f32.mrf.mxu0
    %v231 = vadd.f32 %v151, %v230
    %232 = vmatmul.f32.gmra.mxu0 %v122
    %v233 = vpop.f32.mrf.mxu0
    %v234 = vadd.f32 %v151, %v233
    %235 = vmatmul.f32.gmra.mxu0 %v123
    %v236 = vpop.f32.mrf.mxu0
    %v237 = vadd.f32 %v151, %v236
    %238 = vmatmul.f32.gmra.mxu0 %v124
    %v239 = vpop.f32.mrf.mxu0
    %v240 = vadd.f32 %v151, %v239
    %241 = vmatmul.f32.gmra.mxu0 %v125
    %v242 = vpop.f32.mrf.mxu0
    %v243 = vadd.f32 %v151, %v242
    %244 = vmatmul.f32.gmra.mxu0 %v126
    %v245 = vpop.f32.mrf.mxu0
    %v246 = vadd.f32 %v151, %v245
    %247 = vmatmul.f32.gmra.mxu0 %v127
    %v248 = vpop.f32.mrf.mxu0
    %v249 = vadd.f32 %v151, %v248
    %250 = vmatmul.f32.gmra.mxu0 %v128
    %v251 = vpop.f32.mrf.mxu0
    %v252 = vadd.f32 %v151, %v251
    %253 = vmatmul.f32.gmra.mxu0 %v129
    %v254 = vpop.f32.mrf.mxu0
    %v255 = vadd.f32 %v151, %v254
    %256 = vmatmul.f32.gmra.mxu0 %v130
    %v257 = vpop.f32.mrf.mxu0
    %v258 = vadd.f32 %v151, %v257
    %259 = vmatmul.f32.gmra.mxu0 %v131
    %v260 = vpop.f32.mrf.mxu0
    %v261 = vadd.f32 %v151, %v260
    %262 = vmatmul.f32.gmra.mxu0 %v132
    %v263 = vpop.f32.mrf.mxu0
    %v264 = vadd.f32 %v151, %v263
    %265 = vdwg.mxu0
    %v266 = vmax.f32 %v171, 0.0
    %v267 = vmax.f32 %v174, 0.0
    %v268 = vmax.f32 %v177, 0.0
    %v269 = vmax.f32 %v180, 0.0
    %v270 = vmax.f32 %v183, 0.0
    %v271 = vmax.f32 %v186, 0.0
    %v272 = vmax.f32 %v189, 0.0
    %v273 = vmax.f32 %v192, 0.0
    %v274 = vmax.f32 %v195, 0.0
    %v275 = vmax.f32 %v198, 0.0
    %v276 = vmax.f32 %v201, 0.0
    %v277 = vmax.f32 %v204, 0.0
    %v278 = vmax.f32 %v207, 0.0
    %v279 = vmax.f32 %v210, 0.0
    %v280 = vmax.f32 %v213, 0.0
    %v281 = vmax.f32 %v216, 0.0
    %v282 = vmax.f32 %v219, 0.0
    %v283 = vmax.f32 %v222, 0.0
    %v284 = vmax.f32 %v225, 0.0
    %v285 = vmax.f32 %v228, 0.0
    %v286 = vmax.f32 %v231, 0.0
    %v287 = vmax.f32 %v234, 0.0
    %v288 = vmax.f32 %v237, 0.0
    %v289 = vmax.f32 %v240, 0.0
    %v290 = vmax.f32 %v243, 0.0
    %v291 = vmax.f32 %v246, 0.0
    %v292 = vmax.f32 %v249, 0.0
    %v293 = vmax.f32 %v252, 0.0
    %v294 = vmax.f32 %v255, 0.0
    %v295 = vmax.f32 %v258, 0.0
    %v296 = vmax.f32 %v261, 0.0
    %v297 = vmax.f32 %v264, 0.0
    %v298 = vld [vmem:[#allocation8] sm:$0xff]
    %v299 = vld [vmem:[#allocation8 + $0x8] sm:$0xff]
    %v300 = vld [vmem:[#allocation8 + $0x10] sm:$0xff]
    %v301 = vld [vmem:[#allocation8 + $0x18] sm:$0xff]
    %v302 = vld [vmem:[#allocation8 + $0x20] sm:$0xff]
    %v303 = vld [vmem:[#allocation8 + $0x28] sm:$0xff]
    %v304 = vld [vmem:[#allocation8 + $0x30] sm:$0xff]
    %v305 = vld [vmem:[#allocation8 + $0x38] sm:$0xff]
    %v306 = vld [vmem:[#allocation8 + $0x40] sm:$0xff]
    %v307 = vld [vmem:[#allocation8 + $0x48] sm:$0xff]
    %v308 = vld [vmem:[#allocation8 + $0x50] sm:$0xff]
    %v309 = vld [vmem:[#allocation8 + $0x58] sm:$0xff]
    %v310 = vld [vmem:[#allocation8 + $0x60] sm:$0xff]
    %v311 = vld [vmem:[#allocation8 + $0x68] sm:$0xff]
    %v312 = vld [vmem:[#allocation8 + $0x70] sm:$0xff]
    %v313 = vld [vmem:[#allocation8 + $0x78] sm:$0xff]
    %v314 = vld [vmem:[%s5] sm:$0x1]
    %v316 = vperm.slane %v314, 0
    %318 = vmatpush.msra.mxu0 %v313
    %319 = vmatpush.msra.mxu0 %v312
    %320 = vmatpush.msra.mxu0 %v311
    %321 = vmatpush.msra.mxu0 %v310
    %322 = vmatpush.msra.mxu0 %v309
    %323 = vmatpush.msra.mxu0 %v308
    %324 = vmatpush.msra.mxu0 %v307
    %325 = vmatpush.msra.mxu0 %v306
    %326 = vmatpush.msra.mxu0 %v305
    %327 = vmatpush.msra.mxu0 %v304
    %328 = vmatpush.msra.mxu0 %v303
    %329 = vmatpush.msra.mxu0 %v302
    %330 = vmatpush.msra.mxu0 %v301
    %331 = vmatpush.msra.mxu0 %v300
    %332 = vmatpush.msra.mxu0 %v299
    %333 = vmatpush.msra.mxu0 %v298
    %334 = vmatmul.f32.gmra.mxu0 %v266
    %v335 = vpop.f32.mrf.mxu0
    %v336 = vadd.f32 %v316, %v335
    %337 = vmatmul.f32.gmra.mxu0 %v267
    %v338 = vpop.f32.mrf.mxu0
    %v339 = vadd.f32 %v316, %v338
    %340 = vmatmul.f32.gmra.mxu0 %v268
    %v341 = vpop.f32.mrf.mxu0
    %v342 = vadd.f32 %v316, %v341
    %343 = vmatmul.f32.gmra.mxu0 %v269
    %v344 = vpop.f32.mrf.mxu0
    %v345 = vadd.f32 %v316, %v344
    %346 = vmatmul.f32.gmra.mxu0 %v270
    %v347 = vpop.f32.mrf.mxu0
    %v348 = vadd.f32 %v316, %v347
    %349 = vmatmul.f32.gmra.mxu0 %v271
    %v350 = vpop.f32.mrf.mxu0
    %v351 = vadd.f32 %v316, %v350
    %352 = vmatmul.f32.gmra.mxu0 %v272
    %v353 = vpop.f32.mrf.mxu0
    %v354 = vadd.f32 %v316, %v353
    %355 = vmatmul.f32.gmra.mxu0 %v273
    %v356 = vpop.f32.mrf.mxu0
    %v357 = vadd.f32 %v316, %v356
    %358 = vmatmul.f32.gmra.mxu0 %v274
    %v359 = vpop.f32.mrf.mxu0
    %v360 = vadd.f32 %v316, %v359
    %361 = vmatmul.f32.gmra.mxu0 %v275
    %v362 = vpop.f32.mrf.mxu0
    %v363 = vadd.f32 %v316, %v362
    %364 = vmatmul.f32.gmra.mxu0 %v276
    %v365 = vpop.f32.mrf.mxu0
    %v366 = vadd.f32 %v316, %v365
    %367 = vmatmul.f32.gmra.mxu0 %v277
    %v368 = vpop.f32.mrf.mxu0
    %v369 = vadd.f32 %v316, %v368
    %370 = vmatmul.f32.gmra.mxu0 %v278
    %v371 = vpop.f32.mrf.mxu0
    %v372 = vadd.f32 %v316, %v371
    %373 = vmatmul.f32.gmra.mxu0 %v279
    %v374 = vpop.f32.mrf.mxu0
    %v375 = vadd.f32 %v316, %v374
    %376 = vmatmul.f32.gmra.mxu0 %v280
    %v377 = vpop.f32.mrf.mxu0
    %v378 = vadd.f32 %v316, %v377
    %379 = vmatmul.f32.gmra.mxu0 %v281
    %v380 = vpop.f32.mrf.mxu0
    %v381 = vadd.f32 %v316, %v380
    %382 = vmatmul.f32.gmra.mxu0 %v282
    %v383 = vpop.f32.mrf.mxu0
    %v384 = vadd.f32 %v316, %v383
    %385 = vmatmul.f32.gmra.mxu0 %v283
    %v386 = vpop.f32.mrf.mxu0
    %v387 = vadd.f32 %v316, %v386
    %388 = vmatmul.f32.gmra.mxu0 %v284
    %v389 = vpop.f32.mrf.mxu0
    %v390 = vadd.f32 %v316, %v389
    %391 = vmatmul.f32.gmra.mxu0 %v285
    %v392 = vpop.f32.mrf.mxu0
    %v393 = vadd.f32 %v316, %v392
    %394 = vmatmul.f32.gmra.mxu0 %v286
    %v395 = vpop.f32.mrf.mxu0
    %v396 = vadd.f32 %v316, %v395
    %397 = vmatmul.f32.gmra.mxu0 %v287
    %v398 = vpop.f32.mrf.mxu0
    %v399 = vadd.f32 %v316, %v398
    %400 = vmatmul.f32.gmra.mxu0 %v288
    %v401 = vpop.f32.mrf.mxu0
    %v402 = vadd.f32 %v316, %v401
    %403 = vmatmul.f32.gmra.mxu0 %v289
    %v404 = vpop.f32.mrf.mxu0
    %v405 = vadd.f32 %v316, %v404
    %406 = vmatmul.f32.gmra.mxu0 %v290
    %v407 = vpop.f32.mrf.mxu0
    %v408 = vadd.f32 %v316, %v407
    %409 = vmatmul.f32.gmra.mxu0 %v291
    %v410 = vpop.f32.mrf.mxu0
    %v411 = vadd.f32 %v316, %v410
    %412 = vmatmul.f32.gmra.mxu0 %v292
    %v413 = vpop.f32.mrf.mxu0
    %v414 = vadd.f32 %v316, %v413
    %415 = vmatmul.f32.gmra.mxu0 %v293
    %v416 = vpop.f32.mrf.mxu0
    %v417 = vadd.f32 %v316, %v416
    %418 = vmatmul.f32.gmra.mxu0 %v294
    %v419 = vpop.f32.mrf.mxu0
    %v420 = vadd.f32 %v316, %v419
    %421 = vmatmul.f32.gmra.mxu0 %v295
    %v422 = vpop.f32.mrf.mxu0
    %v423 = vadd.f32 %v316, %v422
    %424 = vmatmul.f32.gmra.mxu0 %v296
    %v425 = vpop.f32.mrf.mxu0
    %v426 = vadd.f32 %v316, %v425
    %427 = vmatmul.f32.gmra.mxu0 %v297
    %v428 = vpop.f32.mrf.mxu0
    %v429 = vadd.f32 %v316, %v428
    %430 = vdwg.mxu0
    %v431 = vld [vmem:[#allocation2] sm:$0x3]
    %v432 = vlaneseq
    %v433 = vshrl.u32 %v432, 7
    %v434 = vperm.slane %v431, 0
    %v435 = vperm.slane %v431, 1
    %vm436 = vcmp.eq.s32.totalorder %v433, %v434
    %vm437 = vcmp.eq.s32.totalorder %v433, %v435
    %v438 = vsel %vm436, 1, 0
    %v439 = vsel %vm437, 1, 0
    %v440 = vcvt.s32.f32 %v438
    %v441 = vcvt.s32.f32 %v439
    %v442 = vld [vmem:[#allocation10] sm:$0xff]
    %443 = vmatpush.msra.mxu0 %v381
    %444 = vmatpush.msra.mxu0 %v378
    %445 = vmatpush.msra.mxu0 %v375
    %446 = vmatpush.msra.mxu0 %v372
    %447 = vmatpush.msra.mxu0 %v369
    %448 = vmatpush.msra.mxu0 %v366
    %449 = vmatpush.msra.mxu0 %v363
    %450 = vmatpush.msra.mxu0 %v360
    %451 = vmatpush.msra.mxu0 %v357
    %452 = vmatpush.msra.mxu0 %v354
    %453 = vmatpush.msra.mxu0 %v351
    %454 = vmatpush.msra.mxu0 %v348
    %455 = vmatpush.msra.mxu0 %v345
    %456 = vmatpush.msra.mxu0 %v342
    %457 = vmatpush.msra.mxu0 %v339
    %458 = vmatpush.msra.mxu0 %v336
    %459 = vmatmul.f32.gmra.mxu0 %v440
    %v460 = vpop.f32.mrf.mxu0
    %v461 = vadd.f32 0.0, %v460
    %462 = vdwg.mxu0
    %463 = vmatpush.msra.mxu0 %v429
    %464 = vmatpush.msra.mxu0 %v426
    %465 = vmatpush.msra.mxu0 %v423
    %466 = vmatpush.msra.mxu0 %v420
    %467 = vmatpush.msra.mxu0 %v417
    %468 = vmatpush.msra.mxu0 %v414
    %469 = vmatpush.msra.mxu0 %v411
    %470 = vmatpush.msra.mxu0 %v408
    %471 = vmatpush.msra.mxu0 %v405
    %472 = vmatpush.msra.mxu0 %v402
    %473 = vmatpush.msra.mxu0 %v399
    %474 = vmatpush.msra.mxu0 %v396
    %475 = vmatpush.msra.mxu0 %v393
    %476 = vmatpush.msra.mxu0 %v390
    %477 = vmatpush.msra.mxu0 %v387
    %478 = vmatpush.msra.mxu0 %v384
    %479 = vmatmul.f32.gmra.mxu0 %v441
    %v480 = vpop.f32.mrf.mxu0
    %v481 = vadd.f32 %v461, %v480
    %482 = vdwg.mxu0
    %v483 = vadd.f32 %v442, %v481
    %484 = vst [vmem:[#allocation10] sm:$0xff] %v483
    // Predicated region
    $region46: #{tpu_custom_call.1} parent=1 // pred_check
      _
    $region47: #{tpu_custom_call.1} parent=1 // pred_check_branch
      %486 = sbr.rel (0) target = $region49
    $region48: #{tpu_custom_call.1} parent=1 // pred_region
      %488 = vsyncadd [#allocation4], 0
      %s490 = sshll.u32 [#allocation10], 4
      %s491 = int_to_ptr.vmem [resolvable:$true] %s490
      %s492 = sshll.u32 %s6, 4
      %s493 = int_to_ptr.hbm [resolvable:$true] %s492
      %495 = dma.vmem_to_hbm [thread:$0]  %s491, 128, %s493, [#allocation4]
    $region49: #{tpu_custom_call.1} parent=1 // pred_fallthru
      _
    // Predicated region
    $region50: #{tpu_custom_call.1} parent=1 // pred_check
      _
    $region51: #{tpu_custom_call.1} parent=1 // pred_check_branch
      %497 = sbr.rel (0) target = $region53
    $region52: #{tpu_custom_call.1} parent=1 // pred_region
      %499 = dma.done [#allocation4], 128
    $region53: #{tpu_custom_call.1} parent=1 // pred_fallthru
      _
    %500 = vsyncpa [#allocation3], 1
    %501 = vsyncpa [#allocation6], 1
    %502 = vsyncpa [#allocation9], 1
    %503 = vsyncpa [#allocation4], 1

</llo_original>
